<compile_context>
chip_gen: v6e
topology: v6e:2x2x1
jax: 0.10.0
libtpu: 0.0.40
codegen_flags: <defaults>
</compile_context>

<pallas_src>
import jax
import jax.numpy as jnp
from jax import lax
from jax.experimental import pallas as pl
from jax.experimental.pallas import tpu as pltpu

EPS = 1e-12


# ---------------------------------------------------------------------------
# Fused kernel: power iteration + sigma on the zero-padded (Co8, Kp) weight,
# then one spectrally-normalized conv matmul per image in the block.
#   u_ref:     (1, Co8)            f32  (zero-padded current u)
#   w_ref:     (Co8, Kp)           f32  (zero-padded w_bar.reshape(Cout, K))
#   b_ref:     (Co8, 1)            f32  (zero-padded bias)
#   p_ref:     (nb, Kp, H*W)       f32  (zero-padded im2col patches)
#   y_ref:     (nb, Co8, H*W)      f32
#   u_out_ref: (1, 1, Co8)         f32
#   v_out_ref: (1, 1, Kp)          f32
# Zero padding is exact: padded weight rows/cols and padded u entries are
# zero, so v / u_new / sigma and the padded output channels are unaffected.
# ---------------------------------------------------------------------------
def _sn_conv_kernel(u_ref, w_ref, b_ref, p_ref, y_ref, u_out_ref, v_out_ref):
    w = w_ref[...]                                                # (Co8, Kp)
    u = u_ref[...]                                                # (1, Co8)

    # v = l2normalize(W^T u)   (row-vector form: u @ W)
    v = jnp.dot(u, w, preferred_element_type=jnp.float32)         # (1, Kp)
    v = v / (jnp.sqrt(jnp.sum(v * v, keepdims=True)) + EPS)
    # u = l2normalize(W v)     (contract the Kp dims)
    wv = lax.dot_general(v, w, (((1,), (1,)), ((), ())),
                         preferred_element_type=jnp.float32)      # (1, Co8)
    u_new = wv / (jnp.sqrt(jnp.sum(wv * wv, keepdims=True)) + EPS)
    sigma = jnp.sum(u_new * wv, keepdims=True)                    # (1, 1)
    w_s = w * (1.0 / sigma)                                       # scaled weight

    # conv: one MXU matmul per image, (Co8, Kp) @ (Kp, H*W), bias fused
    bias = b_ref[...]                                             # (Co8, 1)
    nb = p_ref.shape[0]
    for b in range(nb):                                           # static unroll
        y_ref[b] = jnp.dot(w_s, p_ref[b],
                           preferred_element_type=jnp.float32) + bias

    u_out_ref[0] = u_new
    v_out_ref[0] = v


def spectral_norm_conv_forward(x, w_bar, bias, u):
    """SpectralNorm(Conv2d).forward ('same' conv, stride 1, odd kernel).

    x: (N, C, H, W); w_bar: (Cout, C, KH, KW); bias: (Cout,); u: (Cout,).
    Returns (y (N, Cout, H, W), u_new (Cout,), v_new (C*KH*KW,)).
    """
    N, C, H, W = x.shape
    Cout, _, KH, KW = w_bar.shape
    ph, pw = KH // 2, KW // 2
    K = C * KH * KW
    HW = H * W
    Kp = 128 * pl.cdiv(K, 128)          # contraction dim, lane/MXU-dense
    Co8 = 8 * pl.cdiv(Cout, 8)          # output channels: sublane padding only

    f32 = jnp.float32
    x = x.astype(f32)

    # im2col in XLA: lane-dense K-padded patches (N, Kp, H*W).
    # Row index = c*KH*KW + dy*KW + dx, matching w_bar.reshape(Cout, -1).
    xp = jnp.pad(x, ((0, 0), (0, 0), (ph, ph), (pw, pw)))
    wins = [xp[:, :, dy:dy + H, dx:dx + W]
            for dy in range(KH) for dx in range(KW)]
    patches = jnp.stack(wins, axis=2).reshape(N, K, HW)
    patches = jnp.pad(patches, ((0, 0), (0, Kp - K), (0, 0)))

    # zero-padded small operands (exact math, see kernel docstring)
    w_mat = jnp.pad(w_bar.astype(f32).reshape(Cout, K),
                    ((0, Co8 - Cout), (0, Kp - K)))
    b_col = jnp.pad(bias.astype(f32).reshape(Cout, 1), ((0, Co8 - Cout), (0, 0)))
    u_row = jnp.pad(u.astype(f32).reshape(1, Cout), ((0, 0), (0, Co8 - Cout)))

    # >= 2 grid steps (keeps both v7x TensorCores busy); several images per
    # step for larger N to amortize per-step pipeline overhead.
    block_n = 1
    for nb in (8, 4, 2):
        if N % nb == 0 and N // nb >= 2:
            block_n = nb
            break
    grid_n = N // block_n

    y_pad, u_out, v_out = pl.pallas_call(
        _sn_conv_kernel,
        grid=(grid_n,),
        in_specs=[
            pl.BlockSpec((1, Co8), lambda n: (0, 0)),              # u (grid-resident)
            pl.BlockSpec((Co8, Kp), lambda n: (0, 0)),             # weight (grid-resident)
            pl.BlockSpec((Co8, 1), lambda n: (0, 0)),              # bias (grid-resident)
            pl.BlockSpec((block_n, Kp, HW), lambda n: (n, 0, 0)),  # patches
        ],
        out_specs=[
            pl.BlockSpec((block_n, Co8, HW), lambda n: (n, 0, 0)),
            pl.BlockSpec((1, 1, Co8), lambda n: (n, 0, 0)),
            pl.BlockSpec((1, 1, Kp), lambda n: (n, 0, 0)),
        ],
        out_shape=[
            jax.ShapeDtypeStruct((N, Co8, HW), f32),
            jax.ShapeDtypeStruct((grid_n, 1, Co8), f32),
            jax.ShapeDtypeStruct((grid_n, 1, Kp), f32),
        ],
        compiler_params=pltpu.CompilerParams(
            dimension_semantics=("parallel",)),
    )(u_row, w_mat, b_col, patches)

    # (N, Co8, H*W) -> NCHW directly; slice away sublane/lane padding (tiny XLA ops)
    y = y_pad[:, :Cout, :].reshape(N, Cout, H, W)
    u_new = u_out[0, 0, :Cout]
    v_new = v_out[0, 0, :K]
    return y, u_new, v_new


if __name__ == "__main__":
    key = jax.random.PRNGKey(0)
    k1, k2, k3, k4, k5 = jax.random.split(key, 5)

    N, Cin, Cout, Hs, KH = 2, 4, 8, 16, 3
    x = jax.random.normal(k1, (N, Cin, Hs, Hs), jnp.float32)
    w_bar = jax.random.normal(k2, (Cout, Cin, KH, KH), jnp.float32) * 0.1
    bias = jax.random.normal(k3, (Cout,), jnp.float32) * 0.1
    # u, v buffers as in _make_params: normal(0,1) then l2normalize
    u0 = jax.random.normal(k4, (Cout,), jnp.float32)
    u0 = u0 / (jnp.linalg.norm(u0) + EPS)
    v0 = jax.random.normal(k5, (Cin * KH * KH,), jnp.float32)
    v0 = v0 / (jnp.linalg.norm(v0) + EPS)  # v is overwritten first in one forward

    fwd = jax.jit(spectral_norm_conv_forward)
    y, u_new, v_new = fwd(x, w_bar, bias, u0)
    y = jax.block_until_ready(y)

    # pure-JAX reference for sanity
    wm = w_bar.reshape(Cout, -1)
    v_r = wm.T @ u0
    v_r = v_r / (jnp.linalg.norm(v_r) + EPS)
    u_r = wm @ v_r
    u_r = u_r / (jnp.linalg.norm(u_r) + EPS)
    sigma = u_r @ (wm @ v_r)
    w_ref = (wm / sigma).reshape(w_bar.shape)
    y_ref = lax.conv_general_dilated(
        x, w_ref, (1, 1), "SAME", dimension_numbers=("NCHW", "OIHW", "NCHW")
    ) + bias.reshape(1, Cout, 1, 1)

    assert y.shape == (N, Cout, Hs, Hs)
    assert jnp.allclose(y, y_ref, atol=1e-4, rtol=1e-4)
    assert jnp.allclose(u_new, u_r, atol=1e-5, rtol=1e-5)
    assert jnp.allclose(v_new, v_r, atol=1e-5, rtol=1e-5)
    print("KERNEL_OK")
</pallas_src>

<mosaic_0001>
module attributes {stable_mosaic.version = 11 : i64} {
  func.func @_sn_conv_kernel(%arg0: i32, %arg1: memref<1x8xf32, #tpu.memory_space<vmem>>, %arg2: memref<8x128xf32, #tpu.memory_space<vmem>>, %arg3: memref<8x1xf32, #tpu.memory_space<vmem>>, %arg4: memref<1x128x256xf32, #tpu.memory_space<vmem>>, %arg5: memref<1x8x256xf32, #tpu.memory_space<vmem>>, %arg6: memref<1x1x8xf32, #tpu.memory_space<vmem>>, %arg7: memref<1x1x128xf32, #tpu.memory_space<vmem>>) attributes {dimension_semantics = [#tpu.dimension_semantics<parallel>], iteration_bounds = array<i64: 2>, scalar_prefetch = 0 : i64, scratch_operands = 0 : i64, tpu.core_type = #tpu.core_type<tc>, window_params = [{pipeline_mode = #tpu.pipeline_mode<synchronous>, transform_indices = @transform_0, window_bounds = array<i64: 1, 8>}, {pipeline_mode = #tpu.pipeline_mode<synchronous>, transform_indices = @transform_1, window_bounds = array<i64: 8, 128>}, {pipeline_mode = #tpu.pipeline_mode<synchronous>, transform_indices = @transform_2, window_bounds = array<i64: 8, 1>}, {transform_indices = @transform_3, window_bounds = array<i64: 1, 128, 256>}, {transform_indices = @transform_4, window_bounds = array<i64: 1, 8, 256>}, {transform_indices = @transform_5, window_bounds = array<i64: 1, 1, 8>}, {transform_indices = @transform_6, window_bounds = array<i64: 1, 1, 128>}]} {
    %c0 = arith.constant 0 : index
    %c0_0 = arith.constant 0 : index
    %0 = vector.load %arg2[%c0, %c0_0] : memref<8x128xf32, #tpu.memory_space<vmem>>, vector<8x128xf32>
    %c0_1 = arith.constant 0 : index
    %c0_2 = arith.constant 0 : index
    %1 = vector.load %arg1[%c0_1, %c0_2] : memref<1x8xf32, #tpu.memory_space<vmem>>, vector<1x8xf32>
    %cst = arith.constant dense<0.000000e+00> : vector<1x128xf32>
    %2 = tpu.matmul %1, %0, %cst {dimension_numbers = #tpu.dot_dimension_numbers<[1], [0], [0], [1], [0, 0, 1, 1], [], []>} : vector<1x8xf32>, vector<8x128xf32>, vector<1x128xf32> -> vector<1x128xf32>
    %3 = arith.mulf %2, %2 : vector<1x128xf32>
    %4 = vector.shape_cast %3 : vector<1x128xf32> to vector<1x1x128xf32>
    %cst_3 = arith.constant dense<0.000000e+00> : vector<1xf32>
    %5 = vector.multi_reduction <add>, %4, %cst_3 [1, 2] : vector<1x1x128xf32> to vector<1xf32>
    %6 = vector.shape_cast %5 : vector<1xf32> to vector<1x1x1xf32>
    %7 = vector.extract %6[0, 0, 0] : f32 from vector<1x1x1xf32>
    %8 = vector.broadcast %7 : f32 to vector<1x1xf32>
    %9 = math.sqrt %8 : vector<1x1xf32>
    %cst_4 = arith.constant 9.99999996E-13 : f32
    %10 = vector.broadcast %cst_4 : f32 to vector<1x1xf32>
    %11 = arith.addf %9, %10 : vector<1x1xf32>
    %12 = vector.broadcast %11 : vector<1x1xf32> to vector<1x128xf32>
    %13 = arith.divf %2, %12 : vector<1x128xf32>
    %cst_5 = arith.constant dense<0.000000e+00> : vector<1x8xf32>
    %14 = tpu.matmul %13, %0, %cst_5 {dimension_numbers = #tpu.dot_dimension_numbers<[1], [1], [0], [0], [0, 0, 1, 0], [], []>} : vector<1x128xf32>, vector<8x128xf32>, vector<1x8xf32> -> vector<1x8xf32>
    %15 = arith.mulf %14, %14 : vector<1x8xf32>
    %16 = vector.shape_cast %15 : vector<1x8xf32> to vector<1x1x8xf32>
    %cst_6 = arith.constant dense<0.000000e+00> : vector<1xf32>
    %17 = vector.multi_reduction <add>, %16, %cst_6 [1, 2] : vector<1x1x8xf32> to vector<1xf32>
    %18 = vector.shape_cast %17 : vector<1xf32> to vector<1x1x1xf32>
    %19 = vector.extract %18[0, 0, 0] : f32 from vector<1x1x1xf32>
    %20 = vector.broadcast %19 : f32 to vector<1x1xf32>
    %21 = math.sqrt %20 : vector<1x1xf32>
    %cst_7 = arith.constant 9.99999996E-13 : f32
    %22 = vector.broadcast %cst_7 : f32 to vector<1x1xf32>
    %23 = arith.addf %21, %22 : vector<1x1xf32>
    %24 = vector.broadcast %23 : vector<1x1xf32> to vector<1x8xf32>
    %25 = arith.divf %14, %24 : vector<1x8xf32>
    %26 = arith.mulf %25, %14 : vector<1x8xf32>
    %27 = vector.shape_cast %26 : vector<1x8xf32> to vector<1x1x8xf32>
    %cst_8 = arith.constant dense<0.000000e+00> : vector<1xf32>
    %28 = vector.multi_reduction <add>, %27, %cst_8 [1, 2] : vector<1x1x8xf32> to vector<1xf32>
    %29 = vector.shape_cast %28 : vector<1xf32> to vector<1x1x1xf32>
    %30 = vector.extract %29[0, 0, 0] : f32 from vector<1x1x1xf32>
    %31 = vector.broadcast %30 : f32 to vector<1x1xf32>
    %cst_9 = arith.constant 1.000000e+00 : f32
    %32 = vector.broadcast %cst_9 : f32 to vector<1x1xf32>
    %33 = arith.divf %32, %31 : vector<1x1xf32>
    %34 = vector.broadcast %33 : vector<1x1xf32> to vector<8x128xf32>
    %35 = arith.mulf %0, %34 : vector<8x128xf32>
    %c0_10 = arith.constant 0 : index
    %c0_11 = arith.constant 0 : index
    %36 = vector.load %arg3[%c0_10, %c0_11] : memref<8x1xf32, #tpu.memory_space<vmem>>, vector<8x1xf32>
    %c0_12 = arith.constant 0 : index
    %c0_13 = arith.constant 0 : index
    %c0_14 = arith.constant 0 : index
    %37 = vector.load %arg4[%c0_12, %c0_13, %c0_14] : memref<1x128x256xf32, #tpu.memory_space<vmem>>, vector<1x128x256xf32>
    %38 = vector.shape_cast %37 : vector<1x128x256xf32> to vector<128x256xf32>
    %cst_15 = arith.constant dense<0.000000e+00> : vector<8x256xf32>
    %39 = tpu.matmul %35, %38, %cst_15 {dimension_numbers = #tpu.dot_dimension_numbers<[1], [0], [0], [1], [0, 0, 1, 1], [], []>} : vector<8x128xf32>, vector<128x256xf32>, vector<8x256xf32> -> vector<8x256xf32>
    %40 = vector.broadcast %36 : vector<8x1xf32> to vector<8x256xf32>
    %41 = arith.addf %39, %40 : vector<8x256xf32>
    %c0_16 = arith.constant 0 : index
    %c0_17 = arith.constant 0 : index
    %c0_18 = arith.constant 0 : index
    %42 = vector.load %arg5[%c0_16, %c0_17, %c0_18] : memref<1x8x256xf32, #tpu.memory_space<vmem>>, vector<1x8x256xf32>
    %43 = vector.shape_cast %42 : vector<1x8x256xf32> to vector<8x256xf32>
    %44 = vector.shape_cast %41 : vector<8x256xf32> to vector<1x8x256xf32>
    tpu.vector_store %arg5[%c0_16, %c0_17, %c0_18], %44 {strides = array<i32>} : memref<1x8x256xf32, #tpu.memory_space<vmem>>, vector<1x8x256xf32>,
    %c0_19 = arith.constant 0 : index
    %c0_20 = arith.constant 0 : index
    %c0_21 = arith.constant 0 : index
    %45 = vector.load %arg6[%c0_19, %c0_20, %c0_21] : memref<1x1x8xf32, #tpu.memory_space<vmem>>, vector<1x1x8xf32>
    %46 = vector.shape_cast %45 : vector<1x1x8xf32> to vector<1x8xf32>
    %47 = vector.shape_cast %25 : vector<1x8xf32> to vector<1x1x8xf32>
    tpu.vector_store %arg6[%c0_19, %c0_20, %c0_21], %47 {strides = array<i32>} : memref<1x1x8xf32, #tpu.memory_space<vmem>>, vector<1x1x8xf32>,
    %c0_22 = arith.constant 0 : index
    %c0_23 = arith.constant 0 : index
    %c0_24 = arith.constant 0 : index
    %48 = vector.load %arg7[%c0_22, %c0_23, %c0_24] : memref<1x1x128xf32, #tpu.memory_space<vmem>>, vector<1x1x128xf32>
    %49 = vector.shape_cast %48 : vector<1x1x128xf32> to vector<1x128xf32>
    %50 = vector.shape_cast %13 : vector<1x128xf32> to vector<1x1x128xf32>
    tpu.vector_store %arg7[%c0_22, %c0_23, %c0_24], %50 {strides = array<i32>} : memref<1x1x128xf32, #tpu.memory_space<vmem>>, vector<1x1x128xf32>,
    return
  }
  func.func @transform_0(%arg0: i32) -> (i32, i32) {
    %c0_i32 = arith.constant 0 : i32
    %c0_i32_0 = arith.constant 0 : i32
    %c0_i32_1 = arith.constant 0 : i32
    return %c0_i32, %c0_i32_0 : i32, i32
  }
  func.func @transform_1(%arg0: i32) -> (i32, i32) {
    %c0_i32 = arith.constant 0 : i32
    %c0_i32_0 = arith.constant 0 : i32
    %c0_i32_1 = arith.constant 0 : i32
    return %c0_i32, %c0_i32_0 : i32, i32
  }
  func.func @transform_2(%arg0: i32) -> (i32, i32) {
    %c0_i32 = arith.constant 0 : i32
    %c0_i32_0 = arith.constant 0 : i32
    %c0_i32_1 = arith.constant 0 : i32
    return %c0_i32, %c0_i32_0 : i32, i32
  }
  func.func @transform_3(%arg0: i32) -> (i32, i32, i32) {
    %c0_i32 = arith.constant 0 : i32
    %c0_i32_0 = arith.constant 0 : i32
    %c0_i32_1 = arith.constant 0 : i32
    return %arg0, %c0_i32, %c0_i32_0 : i32, i32, i32
  }
  func.func @transform_4(%arg0: i32) -> (i32, i32, i32) {
    %c0_i32 = arith.constant 0 : i32
    %c0_i32_0 = arith.constant 0 : i32
    %c0_i32_1 = arith.constant 0 : i32
    return %arg0, %c0_i32, %c0_i32_0 : i32, i32, i32
  }
  func.func @transform_5(%arg0: i32) -> (i32, i32, i32) {
    %c0_i32 = arith.constant 0 : i32
    %c0_i32_0 = arith.constant 0 : i32
    %c0_i32_1 = arith.constant 0 : i32
    return %arg0, %c0_i32, %c0_i32_0 : i32, i32, i32
  }
  func.func @transform_6(%arg0: i32) -> (i32, i32, i32) {
    %c0_i32 = arith.constant 0 : i32
    %c0_i32_0 = arith.constant 0 : i32
    %c0_i32_1 = arith.constant 0 : i32
    return %arg0, %c0_i32, %c0_i32_0 : i32, i32, i32
  }
}

</mosaic_0001>

<llo_original>
// kernel: spectral_norm_conv_forward.1
$region0: #{spectral_norm_conv_forward.1}
  #allocation0 [shape = 'u32[]', space=smem, size = 0x4, offset = 0x4, fixed_abs, tag = 'smem constant byte address 0x4 - core index']
  #allocation1 [shape = 'u32[144,128]{1,0:T(1,128)}', space=vmem, size = 0x12000, scoped, tag = 'internal scratch']
  %s0 = inlined_call_operand.vmem [shape: f32[1,8], index: 0, kind: input, shape index: {}]
  %s1 = inlined_call_operand.vmem [shape: f32[8,128], index: 1, kind: input, shape index: {}]
  %s2 = inlined_call_operand.vmem [shape: f32[8,1], index: 2, kind: input, shape index: {}]
  %s3 = inlined_call_operand.vmem [shape: f32[2,128,256], index: 3, kind: input, shape index: {}]
  %s4 = inlined_call_operand.vmem [shape: f32[2,8,256], index: 4, kind: output, shape index: {0}]
  %s5 = inlined_call_operand.vmem [shape: f32[2,1,8], index: 5, kind: output, shape index: {1}]
  %s6 = inlined_call_operand.vmem [shape: f32[2,1,128], index: 6, kind: output, shape index: {2}]
  %7 = xla_tuple %s4, %s5, %s6
  %s8 = sld [smem:[#allocation0]]
  $region65: #{spectral_norm_conv_forward.1} parent=0
    _
  %s10 = ssub.s32 1, %s8
  %s11 = scalar_select 0, %s10, %s8
  loop: start=0, step=1, limit=4
  $region2: #{spectral_norm_conv_forward.1} parent=0 // loop_pre_header
    _
  $region3: #{spectral_norm_conv_forward.1} parent=0 // loop_header
    %s13 = sphi 0, %s17
    %p14 = scmp.ge.s32.totalorder %s13, 4
    %s21 = sphi 0, %s21
    %s23 = sphi 0, %s21
    %s24 = sphi 0, %s23
    %s38 = sphi 0, %s24
    %s42 = sphi 0, %s42
    %s44 = sphi 0, %s42
    %s45 = sphi 0, %s44
    %s59 = sphi 0, %s45
    %s63 = sphi 0, %s63
    %s65 = sphi 0, %s63
    %s66 = sphi 0, %s65
    %s80 = sphi 0, %s66
    %s86 = sphi 0, %s88
    %s89 = sphi 0, %s86
    %s90 = sphi 0, %s89
    %s106 = sphi 0, %s90
    %s112 = sphi 0, %s114
    %s115 = sphi 0, %s112
    %s116 = sphi 0, %s115
    %s132 = sphi 0, %s116
    %s138 = sphi 0, %s140
    %s141 = sphi 0, %s138
    %s142 = sphi 0, %s141
    %s158 = sphi 0, %s142
    %s164 = sphi 0, %s166
    %s167 = sphi 0, %s164
    %s168 = sphi 0, %s167
    %s184 = sphi 0, %s168
  $region4: #{spectral_norm_conv_forward.1} parent=0 // loop_header_branch
    %16 = sbr.rel (%p14) target = $region8
  $region5: #{spectral_norm_conv_forward.1} parent=0 // loop_body
    %s18 = ssub.s32 %s13, 1
    %s19 = ssub.s32 %s13, 2
    %s20 = sadd.s32 %s13, 1
    %s22 = sadd.s32 %s21, 1
    %p25 = scmp.eq.s32.totalorder %s13, 1
    %p26 = scmp.ne.s32.totalorder %s21, %s23
    %p27 = scmp.eq.s32.totalorder %s13, 0
    %p28 = por %p26, %p27
    %p29 = scmp.ne.s32.totalorder %s21, %s23
    %p30 = scmp.eq.s32.totalorder %s18, 1
    %p31 = por %p29, %p30
    %p32 = scmp.ne.s32.totalorder %s23, %s24
    %p33 = scmp.eq.s32.totalorder %s18, 0
    %p34 = por %p32, %p33
    %p35 = scmp.ne.s32.totalorder %s23, %s24
    %p36 = scmp.eq.s32.totalorder %s19, 1
    %p37 = por %p35, %p36
    %p39 = scmp.ne.s32.totalorder %s24, %s38
    %p40 = scmp.eq.s32.totalorder %s19, 0
    %p41 = por %p39, %p40
    %s43 = sadd.s32 %s42, 1
    %p46 = scmp.eq.s32.totalorder %s13, 1
    %p47 = scmp.ne.s32.totalorder %s42, %s44
    %p48 = scmp.eq.s32.totalorder %s13, 0
    %p49 = por %p47, %p48
    %p50 = scmp.ne.s32.totalorder %s42, %s44
    %p51 = scmp.eq.s32.totalorder %s18, 1
    %p52 = por %p50, %p51
    %p53 = scmp.ne.s32.totalorder %s44, %s45
    %p54 = scmp.eq.s32.totalorder %s18, 0
    %p55 = por %p53, %p54
    %p56 = scmp.ne.s32.totalorder %s44, %s45
    %p57 = scmp.eq.s32.totalorder %s19, 1
    %p58 = por %p56, %p57
    %p60 = scmp.ne.s32.totalorder %s45, %s59
    %p61 = scmp.eq.s32.totalorder %s19, 0
    %p62 = por %p60, %p61
    %s64 = sadd.s32 %s63, 1
    %p67 = scmp.eq.s32.totalorder %s13, 1
    %p68 = scmp.ne.s32.totalorder %s63, %s65
    %p69 = scmp.eq.s32.totalorder %s13, 0
    %p70 = por %p68, %p69
    %p71 = scmp.ne.s32.totalorder %s63, %s65
    %p72 = scmp.eq.s32.totalorder %s18, 1
    %p73 = por %p71, %p72
    %p74 = scmp.ne.s32.totalorder %s65, %s66
    %p75 = scmp.eq.s32.totalorder %s18, 0
    %p76 = por %p74, %p75
    %p77 = scmp.ne.s32.totalorder %s65, %s66
    %p78 = scmp.eq.s32.totalorder %s19, 1
    %p79 = por %p77, %p78
    %p81 = scmp.ne.s32.totalorder %s66, %s80
    %p82 = scmp.eq.s32.totalorder %s19, 0
    %p83 = por %p81, %p82
    %s84 = ssub.s32 %s13, %s20
    %p85 = scmp.eq.s32.totalorder %s84, 0
    %s87 = sadd.s32 %s86, 1
    %s88 = scalar_select %p85, %s86, %s87
    %p91 = pneg %p85
    %p92 = scmp.eq.s32.totalorder %s13, 1
    %p93 = por %p91, %p92
    %p94 = scmp.ne.s32.totalorder %s86, %s89
    %p95 = scmp.eq.s32.totalorder %s13, 0
    %p96 = por %p94, %p95
    %p97 = scmp.ne.s32.totalorder %s86, %s89
    %p98 = scmp.eq.s32.totalorder %s18, 1
    %p99 = por %p97, %p98
    %p100 = scmp.ne.s32.totalorder %s89, %s90
    %p101 = scmp.eq.s32.totalorder %s18, 0
    %p102 = por %p100, %p101
    %p103 = scmp.ne.s32.totalorder %s89, %s90
    %p104 = scmp.eq.s32.totalorder %s19, 1
    %p105 = por %p103, %p104
    %p107 = scmp.ne.s32.totalorder %s90, %s106
    %p108 = scmp.eq.s32.totalorder %s19, 0
    %p109 = por %p107, %p108
    %s110 = ssub.s32 %s13, %s20
    %p111 = scmp.eq.s32.totalorder %s110, 0
    %s113 = sadd.s32 %s112, 1
    %s114 = scalar_select %p111, %s112, %s113
    %p117 = pneg %p111
    %p118 = scmp.eq.s32.totalorder %s13, 1
    %p119 = por %p117, %p118
    %p120 = scmp.ne.s32.totalorder %s112, %s115
    %p121 = scmp.eq.s32.totalorder %s13, 0
    %p122 = por %p120, %p121
    %p123 = scmp.ne.s32.totalorder %s112, %s115
    %p124 = scmp.eq.s32.totalorder %s18, 1
    %p125 = por %p123, %p124
    %p126 = scmp.ne.s32.totalorder %s115, %s116
    %p127 = scmp.eq.s32.totalorder %s18, 0
    %p128 = por %p126, %p127
    %p129 = scmp.ne.s32.totalorder %s115, %s116
    %p130 = scmp.eq.s32.totalorder %s19, 1
    %p131 = por %p129, %p130
    %p133 = scmp.ne.s32.totalorder %s116, %s132
    %p134 = scmp.eq.s32.totalorder %s19, 0
    %p135 = por %p133, %p134
    %s136 = ssub.s32 %s13, %s20
    %p137 = scmp.eq.s32.totalorder %s136, 0
    %s139 = sadd.s32 %s138, 1
    %s140 = scalar_select %p137, %s138, %s139
    %p143 = pneg %p137
    %p144 = scmp.eq.s32.totalorder %s13, 1
    %p145 = por %p143, %p144
    %p146 = scmp.ne.s32.totalorder %s138, %s141
    %p147 = scmp.eq.s32.totalorder %s13, 0
    %p148 = por %p146, %p147
    %p149 = scmp.ne.s32.totalorder %s138, %s141
    %p150 = scmp.eq.s32.totalorder %s18, 1
    %p151 = por %p149, %p150
    %p152 = scmp.ne.s32.totalorder %s141, %s142
    %p153 = scmp.eq.s32.totalorder %s18, 0
    %p154 = por %p152, %p153
    %p155 = scmp.ne.s32.totalorder %s141, %s142
    %p156 = scmp.eq.s32.totalorder %s19, 1
    %p157 = por %p155, %p156
    %p159 = scmp.ne.s32.totalorder %s142, %s158
    %p160 = scmp.eq.s32.totalorder %s19, 0
    %p161 = por %p159, %p160
    %s162 = ssub.s32 %s13, %s20
    %p163 = scmp.eq.s32.totalorder %s162, 0
    %s165 = sadd.s32 %s164, 1
    %s166 = scalar_select %p163, %s164, %s165
    %p169 = pneg %p163
    %p170 = scmp.eq.s32.totalorder %s13, 1
    %p171 = por %p169, %p170
    %p172 = scmp.ne.s32.totalorder %s164, %s167
    %p173 = scmp.eq.s32.totalorder %s13, 0
    %p174 = por %p172, %p173
    %p175 = scmp.ne.s32.totalorder %s164, %s167
    %p176 = scmp.eq.s32.totalorder %s18, 1
    %p177 = por %p175, %p176
    %p178 = scmp.ne.s32.totalorder %s167, %s168
    %p179 = scmp.eq.s32.totalorder %s18, 0
    %p180 = por %p178, %p179
    %p181 = scmp.ne.s32.totalorder %s167, %s168
    %p182 = scmp.eq.s32.totalorder %s19, 1
    %p183 = por %p181, %p182
    %p185 = scmp.ne.s32.totalorder %s168, %s184
    %p186 = scmp.eq.s32.totalorder %s19, 0
    %p187 = por %p185, %p186
    %p188 = scmp.le.s32.totalorder 1, %s13
    %p189 = scmp.lt.s32.totalorder %s13, 3
    %p190 = pnand %p188, %p189
    %p191 = pneg %p190
    // Predicated region
    $region9: #{spectral_norm_conv_forward.1} parent=5 // pred_check
      _
    $region10: #{spectral_norm_conv_forward.1} parent=5 // pred_check_branch
      %193 = sbr.rel (%p190) target = $region12
    $region11: #{spectral_norm_conv_forward.1} parent=5 // pred_region
      %s194 = ssub.s32 %s13, 1
      // Predicated region
      $region13: #{spectral_norm_conv_forward.1} parent=11 // pred_check
        %p195 = pneg %p34
      $region14: #{spectral_norm_conv_forward.1} parent=11 // pred_check_branch
        %197 = sbr.rel (%p195) target = $region16
      $region15: #{spectral_norm_conv_forward.1} parent=11 // pred_region
        _
      $region16: #{spectral_norm_conv_forward.1} parent=11 // pred_fallthru
        _
      // Predicated region
      $region17: #{spectral_norm_conv_forward.1} parent=11 // pred_check
        %p198 = pneg %p55
      $region18: #{spectral_norm_conv_forward.1} parent=11 // pred_check_branch
        %200 = sbr.rel (%p198) target = $region20
      $region19: #{spectral_norm_conv_forward.1} parent=11 // pred_region
        _
      $region20: #{spectral_norm_conv_forward.1} parent=11 // pred_fallthru
        _
      // Predicated region
      $region21: #{spectral_norm_conv_forward.1} parent=11 // pred_check
        %p201 = pneg %p76
      $region22: #{spectral_norm_conv_forward.1} parent=11 // pred_check_branch
        %203 = sbr.rel (%p201) target = $region24
      $region23: #{spectral_norm_conv_forward.1} parent=11 // pred_region
        _
      $region24: #{spectral_norm_conv_forward.1} parent=11 // pred_fallthru
        _
    $region12: #{spectral_norm_conv_forward.1} parent=5 // pred_fallthru
      _
    %p204 = scmp.lt.s32.totalorder %s13, 2
    // Predicated region
    $region25: #{spectral_norm_conv_forward.1} parent=5 // pred_check
      %p205 = pneg %p204
    $region26: #{spectral_norm_conv_forward.1} parent=5 // pred_check_branch
      %207 = sbr.rel (%p205) target = $region28
    $region27: #{spectral_norm_conv_forward.1} parent=5 // pred_region
      // Predicated region
      $region29: #{spectral_norm_conv_forward.1} parent=27 // pred_check
        %p208 = pneg %p96
      $region30: #{spectral_norm_conv_forward.1} parent=27 // pred_check_branch
        %210 = sbr.rel (%p208) target = $region32
      $region31: #{spectral_norm_conv_forward.1} parent=27 // pred_region
        %p211 = scmp.lt.s32.totalorder %s13, 1
        %s212 = scalar_select %p211, %s13, 1
        %s213 = smul.addr %s212, 32
        %s214 = smul.addr %s213, 8
        %s215 = scalar_lea.vmem %s3, %s214
      $region32: #{spectral_norm_conv_forward.1} parent=27 // pred_fallthru
        _
    $region28: #{spectral_norm_conv_forward.1} parent=5 // pred_fallthru
      _
    %p216 = scmp.le.s32.totalorder 1, %s13
    %p217 = scmp.lt.s32.totalorder %s13, 3
    %p218 = pnand %p216, %p217
    %p219 = pneg %p218
    // Predicated region
    $region33: #{spectral_norm_conv_forward.1} parent=5 // pred_check
      _
    $region34: #{spectral_norm_conv_forward.1} parent=5 // pred_check_branch
      %221 = sbr.rel (%p218) target = $region36
    $region35: #{spectral_norm_conv_forward.1} parent=5 // pred_region
      %s222 = ssub.s32 %s13, 1
      %p223 = pneg %p34
      %p224 = pneg %p31
      %p225 = pneg %p55
      %p226 = pneg %p52
      %p227 = pneg %p76
      %p228 = pneg %p73
      %p229 = scmp.lt.s32.totalorder %s18, 1
      %s230 = scalar_select %p229, %s18, 1
      %s231 = smul.addr %s230, 32
      %s232 = smul.addr %s231, 8
      %s233 = scalar_lea.vmem %s3, %s232
      %p234 = pneg %p102
      %p235 = pneg %p99
      %p236 = pneg %p128
      %p237 = pneg %p125
      %p238 = scmp.lt.s32.totalorder %s18, 1
      %s239 = scalar_select %p238, %s18, 1
      %s240 = smul.addr %s239, 2
      %s241 = smul.addr %s240, 8
      %s242 = scalar_lea.vmem %s4, %s241
      %p243 = pneg %p154
      %p244 = pneg %p151
      %p245 = scmp.lt.s32.totalorder %s18, 1
      %s246 = scalar_select %p245, %s18, 1
      %s247 = scalar_lea.vmem %s5, %s246
      %p248 = pneg %p180
      %p249 = pneg %p177
      %p250 = scmp.lt.s32.totalorder %s18, 1
      %s251 = scalar_select %p250, %s18, 1
      %s252 = scalar_lea.vmem %s6, %s251
      %p253 = scmp.lt.s32.totalorder %s18, 1
      %s254 = scalar_select %p253, %s18, 1
      %s255 = smul.addr %s254, 32
      %s256 = smul.addr %s255, 8
      %s257 = scalar_lea.vmem %s3, %s256
      %p258 = scmp.lt.s32.totalorder %s18, 1
      %s259 = scalar_select %p258, %s18, 1
      %s260 = smul.addr %s259, 2
      %s261 = smul.addr %s260, 8
      %s262 = scalar_lea.vmem %s4, %s261
      %p263 = scmp.lt.s32.totalorder %s18, 1
      %s264 = scalar_select %p263, %s18, 1
      %s265 = scalar_lea.vmem %s5, %s264
      %p266 = scmp.lt.s32.totalorder %s18, 1
      %s267 = scalar_select %p266, %s18, 1
      %s268 = scalar_lea.vmem %s6, %s267
      %v269 = vld [vmem:[%s1] sm:$0xff]
      %v270 = vld [vmem:[%s0] sm:$0x1]
      %vm271 = vcmask 64512
      %v273 = vsel %vm271, %v270, 0
      %275 = vmatprep.subr.mxu0 0.0
      %276 = vmatpush1.msra.mxu0 0.0
      %277 = vmatprep.subr.mxu0 0.0
      %278 = vmatpush1.msra.mxu0 0.0
      %279 = vmatprep.subr.mxu0 0.0
      %280 = vmatpush1.msra.mxu0 0.0
      %281 = vmatprep.subr.mxu0 0.0
      %282 = vmatpush1.msra.mxu0 0.0
      %283 = vmatprep.subr.mxu0 0.0
      %284 = vmatpush1.msra.mxu0 0.0
      %285 = vmatprep.subr.mxu0 0.0
      %286 = vmatpush1.msra.mxu0 0.0
      %287 = vmatprep.subr.mxu0 0.0
      %288 = vmatpush1.msra.mxu0 0.0
      %289 = vmatprep.subr.mxu0 0.0
      %290 = vmatpush1.msra.mxu0 0.0
      %291 = vmatprep.subr.mxu0 0.0
      %292 = vmatpush1.msra.mxu0 0.0
      %293 = vmatprep.subr.mxu0 0.0
      %294 = vmatpush1.msra.mxu0 0.0
      %295 = vmatprep.subr.mxu0 0.0
      %296 = vmatpush1.msra.mxu0 0.0
      %297 = vmatprep.subr.mxu0 0.0
      %298 = vmatpush1.msra.mxu0 0.0
      %299 = vmatprep.subr.mxu0 0.0
      %300 = vmatpush1.msra.mxu0 0.0
      %301 = vmatprep.subr.mxu0 0.0
      %302 = vmatpush1.msra.mxu0 0.0
      %303 = vmatprep.subr.mxu0 0.0
      %304 = vmatpush1.msra.mxu0 0.0
      %305 = vmatprep.subr.mxu0 0.0
      %306 = vmatpush1.msra.mxu0 %v269
      %307 = vmatprep.subr.mxu0 0.0
      %308 = vmatpush2.msra.mxu0 0.0
      %309 = vmatprep.subr.mxu0 0.0
      %310 = vmatpush2.msra.mxu0 0.0
      %311 = vmatprep.subr.mxu0 0.0
      %312 = vmatpush2.msra.mxu0 0.0
      %313 = vmatprep.subr.mxu0 0.0
      %314 = vmatpush2.msra.mxu0 0.0
      %315 = vmatprep.subr.mxu0 0.0
      %316 = vmatpush2.msra.mxu0 0.0
      %317 = vmatprep.subr.mxu0 0.0
      %318 = vmatpush2.msra.mxu0 0.0
      %319 = vmatprep.subr.mxu0 0.0
      %320 = vmatpush2.msra.mxu0 0.0
      %321 = vmatprep.subr.mxu0 0.0
      %322 = vmatpush2.msra.mxu0 0.0
      %323 = vmatprep.subr.mxu0 0.0
      %324 = vmatpush2.msra.mxu0 0.0
      %325 = vmatprep.subr.mxu0 0.0
      %326 = vmatpush2.msra.mxu0 0.0
      %327 = vmatprep.subr.mxu0 0.0
      %328 = vmatpush2.msra.mxu0 0.0
      %329 = vmatprep.subr.mxu0 0.0
      %330 = vmatpush2.msra.mxu0 0.0
      %331 = vmatprep.subr.mxu0 0.0
      %332 = vmatpush2.msra.mxu0 0.0
      %333 = vmatprep.subr.mxu0 0.0
      %334 = vmatpush2.msra.mxu0 0.0
      %335 = vmatprep.subr.mxu0 0.0
      %336 = vmatpush2.msra.mxu0 0.0
      %337 = vmatprep.subr.mxu0 0.0
      %338 = vmatpush2.msra.mxu0 0.0
      %339 = vmatprep.mubr.f32.mxu0 0.0
      %340 = vmatmul.mubr.f32.gmra.mxu0 %v273
      %v341 = vpop.f32.mrf.mxu0
      %v342 = vadd.f32 0.0, %v341
      %v343 = vpop.f32.mrf.mxu0
      %344 = vdwg.mxu0
      %v345 = vmul.f32 %v342, %v342
      %vm346 = vcmask 1040384
      %v347 = vsel %vm346, %v345, 0.0
      %348 = vadd.xlane.f32.xlu0 %v347
      %v349 = vpop.xlane.xlu0 %348
      %v350 = vrot.slane %v349, 4
      %v351 = vadd.f32 %v349, %v350
      %v352 = vrot.slane %v351, 2
      %v353 = vadd.f32 %v351, %v352
      %v354 = vrot.slane %v353, 1
      %v355 = vadd.f32 %v353, %v354
      %s356 = vtos %v355
      %v357 = vstv %s356
      %v358 = vrsqrt.pop %v357
      %v359 = vmul.f32 %v357, %v358
      %vm360 = vcmp.eq.f32.partialorder %v357, inf
      %v361 = vsel %vm360, %v357, %v359
      %vm362 = vcmp.eq.f32.partialorder %v357, 0.0
      %v363 = vand.u32 %v357, 2147483648
      %v364 = vsel %vm362, %v363, %v361
      %v365 = vadd.f32 %v364, 1e-12
      %v366 = vrcp.pop %v365
      %v367 = vmul.f32 %v342, %v366
      %368 = vmatprep.subr.mxu0 0.0
      %369 = vmatpush1.xpose.msra.mxu0 0.0
      %370 = vmatprep.subr.mxu0 0.0
      %371 = vmatpush1.xpose.msra.mxu0 0.0
      %372 = vmatprep.subr.mxu0 0.0
      %373 = vmatpush1.xpose.msra.mxu0 0.0
      %374 = vmatprep.subr.mxu0 0.0
      %375 = vmatpush1.xpose.msra.mxu0 0.0
      %376 = vmatprep.subr.mxu0 0.0
      %377 = vmatpush1.xpose.msra.mxu0 0.0
      %378 = vmatprep.subr.mxu0 0.0
      %379 = vmatpush1.xpose.msra.mxu0 0.0
      %380 = vmatprep.subr.mxu0 0.0
      %381 = vmatpush1.xpose.msra.mxu0 0.0
      %382 = vmatprep.subr.mxu0 0.0
      %383 = vmatpush1.xpose.msra.mxu0 0.0
      %384 = vmatprep.subr.mxu0 0.0
      %385 = vmatpush1.xpose.msra.mxu0 0.0
      %386 = vmatprep.subr.mxu0 0.0
      %387 = vmatpush1.xpose.msra.mxu0 0.0
      %388 = vmatprep.subr.mxu0 0.0
      %389 = vmatpush1.xpose.msra.mxu0 0.0
      %390 = vmatprep.subr.mxu0 0.0
      %391 = vmatpush1.xpose.msra.mxu0 0.0
      %392 = vmatprep.subr.mxu0 0.0
      %393 = vmatpush1.xpose.msra.mxu0 0.0
      %394 = vmatprep.subr.mxu0 0.0
      %395 = vmatpush1.xpose.msra.mxu0 0.0
      %396 = vmatprep.subr.mxu0 0.0
      %397 = vmatpush1.xpose.msra.mxu0 0.0
      %398 = vmatprep.subr.mxu0 0.0
      %399 = vmatpush1.xpose.msra.mxu0 %v269
      %400 = vmatprep.subr.mxu0 0.0
      %401 = vmatpush2.xpose.msra.mxu0 0.0
      %402 = vmatprep.subr.mxu0 0.0
      %403 = vmatpush2.xpose.msra.mxu0 0.0
      %404 = vmatprep.subr.mxu0 0.0
      %405 = vmatpush2.xpose.msra.mxu0 0.0
      %406 = vmatprep.subr.mxu0 0.0
      %407 = vmatpush2.xpose.msra.mxu0 0.0
      %408 = vmatprep.subr.mxu0 0.0
      %409 = vmatpush2.xpose.msra.mxu0 0.0
      %410 = vmatprep.subr.mxu0 0.0
      %411 = vmatpush2.xpose.msra.mxu0 0.0
      %412 = vmatprep.subr.mxu0 0.0
      %413 = vmatpush2.xpose.msra.mxu0 0.0
      %414 = vmatprep.subr.mxu0 0.0
      %415 = vmatpush2.xpose.msra.mxu0 0.0
      %416 = vmatprep.subr.mxu0 0.0
      %417 = vmatpush2.xpose.msra.mxu0 0.0
      %418 = vmatprep.subr.mxu0 0.0
      %419 = vmatpush2.xpose.msra.mxu0 0.0
      %420 = vmatprep.subr.mxu0 0.0
      %421 = vmatpush2.xpose.msra.mxu0 0.0
      %422 = vmatprep.subr.mxu0 0.0
      %423 = vmatpush2.xpose.msra.mxu0 0.0
      %424 = vmatprep.subr.mxu0 0.0
      %425 = vmatpush2.xpose.msra.mxu0 0.0
      %426 = vmatprep.subr.mxu0 0.0
      %427 = vmatpush2.xpose.msra.mxu0 0.0
      %428 = vmatprep.subr.mxu0 0.0
      %429 = vmatpush2.xpose.msra.mxu0 0.0
      %430 = vmatprep.subr.mxu0 0.0
      %431 = vmatpush2.xpose.msra.mxu0 0.0
      %432 = vmatprep.mubr.f32.mxu0 0.0
      %433 = vmatmul.mubr.f32.gmra.mxu0 %v367
      %v434 = vpop.f32.mrf.mxu0
      %v435 = vadd.f32 0.0, %v434
      %v436 = vpop.f32.mrf.mxu0
      %437 = vdwg.mxu0
      %v438 = vmul.f32 %v435, %v435
      %vm439 = vcmask 57344
      %v440 = vsel %vm439, %v438, 0.0
      %441 = vadd.xlane.f32.xlu0 %v440
      %v442 = vpop.xlane.xlu0 %441
      %v443 = vrot.slane %v442, 4
      %v444 = vadd.f32 %v442, %v443
      %v445 = vrot.slane %v444, 2
      %v446 = vadd.f32 %v444, %v445
      %v447 = vrot.slane %v446, 1
      %v448 = vadd.f32 %v446, %v447
      %s449 = vtos %v448
      %v450 = vstv %s449
      %v451 = vrsqrt.pop %v450
      %v452 = vmul.f32 %v450, %v451
      %vm453 = vcmp.eq.f32.partialorder %v450, inf
      %v454 = vsel %vm453, %v450, %v452
      %vm455 = vcmp.eq.f32.partialorder %v450, 0.0
      %v456 = vand.u32 %v450, 2147483648
      %v457 = vsel %vm455, %v456, %v454
      %v458 = vadd.f32 %v457, 1e-12
      %v459 = vrcp.pop %v458
      %v460 = vmul.f32 %v435, %v459
      %v461 = vmul.f32 %v460, %v435
      %v462 = vsel %vm439, %v461, 0.0
      %463 = vadd.xlane.f32.xlu0 %v462
      %v464 = vpop.xlane.xlu0 %463
      %v465 = vrot.slane %v464, 4
      %v466 = vadd.f32 %v464, %v465
      %v467 = vrot.slane %v466, 2
      %v468 = vadd.f32 %v466, %v467
      %v469 = vrot.slane %v468, 1
      %v470 = vadd.f32 %v468, %v469
      %s471 = vtos %v470
      %v472 = vstv %s471
      %v473 = vrcp.pop %v472
      %v474 = vmul.f32 1.0, %v473
      %v475 = vmul.f32 %v269, %v474
      %v476 = vld [vmem:[%s2] sm:$0xff]
      %v477 = vld [vmem:[%s257] sm:$0xff]
      %v478 = vld [vmem:[%s257 + $0x8] sm:$0xff]
      %v479 = vld [vmem:[%s257 + $0x10] sm:$0xff]
      %v480 = vld [vmem:[%s257 + $0x18] sm:$0xff]
      %v481 = vld [vmem:[%s257 + $0x20] sm:$0xff]
      %v482 = vld [vmem:[%s257 + $0x28] sm:$0xff]
      %v483 = vld [vmem:[%s257 + $0x30] sm:$0xff]
      %v484 = vld [vmem:[%s257 + $0x38] sm:$0xff]
      %v485 = vld [vmem:[%s257 + $0x40] sm:$0xff]
      %v486 = vld [vmem:[%s257 + $0x48] sm:$0xff]
      %v487 = vld [vmem:[%s257 + $0x50] sm:$0xff]
      %v488 = vld [vmem:[%s257 + $0x58] sm:$0xff]
      %v489 = vld [vmem:[%s257 + $0x60] sm:$0xff]
      %v490 = vld [vmem:[%s257 + $0x68] sm:$0xff]
      %v491 = vld [vmem:[%s257 + $0x70] sm:$0xff]
      %v492 = vld [vmem:[%s257 + $0x78] sm:$0xff]
      %v493 = vld [vmem:[%s257 + $0x80] sm:$0xff]
      %v494 = vld [vmem:[%s257 + $0x88] sm:$0xff]
      %v495 = vld [vmem:[%s257 + $0x90] sm:$0xff]
      %v496 = vld [vmem:[%s257 + $0x98] sm:$0xff]
      %v497 = vld [vmem:[%s257 + $0xa0] sm:$0xff]
      %v498 = vld [vmem:[%s257 + $0xa8] sm:$0xff]
      %v499 = vld [vmem:[%s257 + $0xb0] sm:$0xff]
      %v500 = vld [vmem:[%s257 + $0xb8] sm:$0xff]
      %v501 = vld [vmem:[%s257 + $0xc0] sm:$0xff]
      %v502 = vld [vmem:[%s257 + $0xc8] sm:$0xff]
      %v503 = vld [vmem:[%s257 + $0xd0] sm:$0xff]
      %v504 = vld [vmem:[%s257 + $0xd8] sm:$0xff]
      %v505 = vld [vmem:[%s257 + $0xe0] sm:$0xff]
      %v506 = vld [vmem:[%s257 + $0xe8] sm:$0xff]
      %v507 = vld [vmem:[%s257 + $0xf0] sm:$0xff]
      %v508 = vld [vmem:[%s257 + $0xf8] sm:$0xff]
      %510 = vset.pattern.permute.xlu0 0
      %511 = vperm.xlu0 %510, %v476
      %v512 = vpop.permute.xlu0 %511
      %514 = vmatprep.subr.mxu0 %v508
      %515 = vmatpush1.msra.mxu0 %v507
      %516 = vmatprep.subr.mxu0 %v506
      %517 = vmatpush1.msra.mxu0 %v505
      %518 = vmatprep.subr.mxu0 %v504
      %519 = vmatpush1.msra.mxu0 %v503
      %520 = vmatprep.subr.mxu0 %v502
      %521 = vmatpush1.msra.mxu0 %v501
      %522 = vmatprep.subr.mxu0 %v500
      %523 = vmatpush1.msra.mxu0 %v499
      %524 = vmatprep.subr.mxu0 %v498
      %525 = vmatpush1.msra.mxu0 %v497
      %526 = vmatprep.subr.mxu0 %v496
      %527 = vmatpush1.msra.mxu0 %v495
      %528 = vmatprep.subr.mxu0 %v494
      %529 = vmatpush1.msra.mxu0 %v493
      %530 = vmatprep.subr.mxu0 %v492
      %531 = vmatpush1.msra.mxu0 %v491
      %532 = vmatprep.subr.mxu0 %v490
      %533 = vmatpush1.msra.mxu0 %v489
      %534 = vmatprep.subr.mxu0 %v488
      %535 = vmatpush1.msra.mxu0 %v487
      %536 = vmatprep.subr.mxu0 %v486
      %537 = vmatpush1.msra.mxu0 %v485
      %538 = vmatprep.subr.mxu0 %v484
      %539 = vmatpush1.msra.mxu0 %v483
      %540 = vmatprep.subr.mxu0 %v482
      %541 = vmatpush1.msra.mxu0 %v481
      %542 = vmatprep.subr.mxu0 %v480
      %543 = vmatpush1.msra.mxu0 %v479
      %544 = vmatprep.subr.mxu0 %v478
      %545 = vmatpush1.msra.mxu0 %v477
      %546 = vmatprep.subr.mxu0 0.0
      %547 = vmatpush2.msra.mxu0 0.0
      %548 = vmatprep.subr.mxu0 0.0
      %549 = vmatpush2.msra.mxu0 0.0
      %550 = vmatprep.subr.mxu0 0.0
      %551 = vmatpush2.msra.mxu0 0.0
      %552 = vmatprep.subr.mxu0 0.0
      %553 = vmatpush2.msra.mxu0 0.0
      %554 = vmatprep.subr.mxu0 0.0
      %555 = vmatpush2.msra.mxu0 0.0
      %556 = vmatprep.subr.mxu0 0.0
      %557 = vmatpush2.msra.mxu0 0.0
      %558 = vmatprep.subr.mxu0 0.0
      %559 = vmatpush2.msra.mxu0 0.0
      %560 = vmatprep.subr.mxu0 0.0
      %561 = vmatpush2.msra.mxu0 0.0
      %562 = vmatprep.subr.mxu0 0.0
      %563 = vmatpush2.msra.mxu0 0.0
      %564 = vmatprep.subr.mxu0 0.0
      %565 = vmatpush2.msra.mxu0 0.0
      %566 = vmatprep.subr.mxu0 0.0
      %567 = vmatpush2.msra.mxu0 0.0
      %568 = vmatprep.subr.mxu0 0.0
      %569 = vmatpush2.msra.mxu0 0.0
      %570 = vmatprep.subr.mxu0 0.0
      %571 = vmatpush2.msra.mxu0 0.0
      %572 = vmatprep.subr.mxu0 0.0
      %573 = vmatpush2.msra.mxu0 0.0
      %574 = vmatprep.subr.mxu0 0.0
      %575 = vmatpush2.msra.mxu0 0.0
      %576 = vmatprep.subr.mxu0 0.0
      %577 = vmatpush2.msra.mxu0 0.0
      %578 = vmatprep.mubr.f32.mxu0 0.0
      %579 = vmatmul.mubr.f32.gmra.mxu0 %v475
      %v580 = vpop.f32.mrf.mxu0
      %v581 = vadd.f32 %v512, %v580
      %v582 = vpop.f32.mrf.mxu0
      %v583 = vadd.f32 %v512, %v582
      %584 = vdwg.mxu0
      %585 = vst [vmem:[%s262] sm:$0xff] %v581
      %586 = vst [vmem:[%s262 + $0x8] sm:$0xff] %v583
      %587 = vst.msk [vmem:[%s265] sm:$0x1] %vm439, %v460
      %588 = vst [vmem:[%s268] sm:$0x1] %v367
      %p589 = scmp.lt.s32.totalorder %s18, 1
      %s590 = scalar_select %p589, %s18, 1
      %s591 = smul.addr %s590, 2
      %s592 = smul.addr %s591, 8
      %s593 = scalar_lea.vmem %s4, %s592
      %p594 = scmp.lt.s32.totalorder %s18, 1
      %s595 = scalar_select %p594, %s18, 1
      %s596 = scalar_lea.vmem %s5, %s595
      %p597 = scmp.lt.s32.totalorder %s18, 1
      %s598 = scalar_select %p597, %s18, 1
      %s599 = scalar_lea.vmem %s6, %s598
      // Predicated region
      $region37: #{spectral_norm_conv_forward.1} parent=35 // pred_check
        %p600 = pneg %p125
      $region38: #{spectral_norm_conv_forward.1} parent=35 // pred_check_branch
        %602 = sbr.rel (%p600) target = $region40
      $region39: #{spectral_norm_conv_forward.1} parent=35 // pred_region
        _
      $region40: #{spectral_norm_conv_forward.1} parent=35 // pred_fallthru
        _
      // Predicated region
      $region41: #{spectral_norm_conv_forward.1} parent=35 // pred_check
        %p603 = pneg %p151
      $region42: #{spectral_norm_conv_forward.1} parent=35 // pred_check_branch
        %605 = sbr.rel (%p603) target = $region44
      $region43: #{spectral_norm_conv_forward.1} parent=35 // pred_region
        _
      $region44: #{spectral_norm_conv_forward.1} parent=35 // pred_fallthru
        _
      // Predicated region
      $region45: #{spectral_norm_conv_forward.1} parent=35 // pred_check
        %p606 = pneg %p177
      $region46: #{spectral_norm_conv_forward.1} parent=35 // pred_check_branch
        %608 = sbr.rel (%p606) target = $region48
      $region47: #{spectral_norm_conv_forward.1} parent=35 // pred_region
        _
      $region48: #{spectral_norm_conv_forward.1} parent=35 // pred_fallthru
        _
    $region36: #{spectral_norm_conv_forward.1} parent=5 // pred_fallthru
      _
    %p609 = scmp.le.s32.totalorder 2, %s13
    // Predicated region
    $region49: #{spectral_norm_conv_forward.1} parent=5 // pred_check
      %p610 = pneg %p609
    $region50: #{spectral_norm_conv_forward.1} parent=5 // pred_check_branch
      %612 = sbr.rel (%p610) target = $region52
    $region51: #{spectral_norm_conv_forward.1} parent=5 // pred_region
      %s613 = ssub.s32 %s13, 2
      // Predicated region
      $region53: #{spectral_norm_conv_forward.1} parent=51 // pred_check
        %p614 = pneg %p131
      $region54: #{spectral_norm_conv_forward.1} parent=51 // pred_check_branch
        %616 = sbr.rel (%p614) target = $region56
      $region55: #{spectral_norm_conv_forward.1} parent=51 // pred_region
        %p617 = scmp.lt.s32.totalorder %s19, 1
        %s618 = scalar_select %p617, %s19, 1
        %s619 = smul.addr %s618, 2
        %s620 = smul.addr %s619, 8
        %s621 = scalar_lea.vmem %s4, %s620
      $region56: #{spectral_norm_conv_forward.1} parent=51 // pred_fallthru
        _
      // Predicated region
      $region57: #{spectral_norm_conv_forward.1} parent=51 // pred_check
        %p622 = pneg %p157
      $region58: #{spectral_norm_conv_forward.1} parent=51 // pred_check_branch
        %624 = sbr.rel (%p622) target = $region60
      $region59: #{spectral_norm_conv_forward.1} parent=51 // pred_region
        %p625 = scmp.lt.s32.totalorder %s19, 1
        %s626 = scalar_select %p625, %s19, 1
        %s627 = scalar_lea.vmem %s5, %s626
      $region60: #{spectral_norm_conv_forward.1} parent=51 // pred_fallthru
        _
      // Predicated region
      $region61: #{spectral_norm_conv_forward.1} parent=51 // pred_check
        %p628 = pneg %p183
      $region62: #{spectral_norm_conv_forward.1} parent=51 // pred_check_branch
        %630 = sbr.rel (%p628) target = $region64
      $region63: #{spectral_norm_conv_forward.1} parent=51 // pred_region
        %p631 = scmp.lt.s32.totalorder %s19, 1
        %s632 = scalar_select %p631, %s19, 1
        %s633 = scalar_lea.vmem %s6, %s632
      $region64: #{spectral_norm_conv_forward.1} parent=51 // pred_fallthru
        _
    $region52: #{spectral_norm_conv_forward.1} parent=5 // pred_fallthru
      _
  $region6: #{spectral_norm_conv_forward.1} parent=0 // loop_footer
    %s17 = sadd.s32 1, %s13
  $region7: #{spectral_norm_conv_forward.1} parent=0 // loop_footer_branch
    %12 = sbr.rel target = $region3
  $region8: #{spectral_norm_conv_forward.1} parent=0 // loop_exit
    _

</llo_original>
